<compile_context>
chip_gen: v6e
topology: v6e:2x2x1
jax: 0.10.0
libtpu: 0.0.40
codegen_flags: <defaults>
</compile_context>

<pallas_src>
import functools

import jax
import jax.numpy as jnp
from jax.experimental import pallas as pl
from jax.experimental.pallas import tpu as pltpu


# ------------------------------- Pallas kernel ------------------------------ #

def fused_masked_attention_kernel(x_ref, wqkv_ref, bqkv_ref, wproj_ref,
                                  bproj_ref, o_ref, *, n_head, scale):
    """Fused c_attn + masked attention + merge_heads + c_proj for one batch."""
    S = x_ref.shape[1]
    nx = x_ref.shape[2]
    D = nx // n_head

    # ---- c_attn: qkv = x @ W_attn + b_attn (bf16 MXU inputs, f32 accum) ----
    x = x_ref[0].astype(jnp.bfloat16)                    # (S, nx)
    qkv = jnp.dot(x, wqkv_ref[...],                      # (S, 3*nx) f32
                  preferred_element_type=jnp.float32) + bqkv_ref[...]

    # ---- causal mask generated in-kernel (no HBM mask traffic) ----
    row = jax.lax.broadcasted_iota(jnp.int32, (S, S), 0)
    col = jax.lax.broadcasted_iota(jnp.int32, (S, S), 1)
    causal = row >= col

    w_proj = wproj_ref[...]                              # (nx, nx) bf16
    acc = jnp.zeros((S, nx), jnp.float32)                # merged+projected out

    for h in range(n_head):                              # static unroll
        q = qkv[:, h * D:(h + 1) * D]                    # (S, D) f32
        k = qkv[:, nx + h * D: nx + (h + 1) * D]
        v = qkv[:, 2 * nx + h * D: 2 * nx + (h + 1) * D]

        if scale:  # fold 1/sqrt(D) into q (SxD mults, not SxS divides)
            q = q * jnp.float32(1.0 / float(D) ** 0.5)

        q = q.astype(jnp.bfloat16)
        k = k.astype(jnp.bfloat16)

        # q @ k^T via dot_general on the last dims -> no explicit transpose.
        s = jax.lax.dot_general(q, k, (((1,), (1,)), ((), ())),
                                preferred_element_type=jnp.float32)  # (S, S)

        # masking + numerically-stable softmax, all in f32
        s = jnp.where(causal, s, jnp.float32(-10000.0))
        s = s - jnp.max(s, axis=-1, keepdims=True)
        p = jnp.exp(s)
        inv_l = pl.reciprocal(jnp.sum(p, axis=-1, keepdims=True), approx=True)

        # attention output for this head (bf16 MXU, f32 accum), normalize last
        o_h = jnp.dot(p.astype(jnp.bfloat16), v.astype(jnp.bfloat16),
                      preferred_element_type=jnp.float32) * inv_l    # (S, D)

        # merge_heads + c_proj fused: out += o_h @ W_proj[h*D:(h+1)*D, :]
        acc = acc + jnp.dot(o_h.astype(jnp.bfloat16),
                            w_proj[h * D:(h + 1) * D, :],
                            preferred_element_type=jnp.float32)

    o_ref[0] = acc + bproj_ref[...]                      # (S, nx) f32


# --------------------------------- Wrapper ---------------------------------- #

def masked_attention_forward(x, params, *, n_head, scale=False):
    """Full MaskedAttention.forward (no cache, no extra masks, eval dropout)."""
    B, S, nx = x.shape

    # Weights in bf16 (MXU-native, half the HBM/VMEM bytes); biases stay f32.
    w_attn = params["w_attn"].astype(jnp.bfloat16)        # (nx, 3*nx)
    w_proj = params["w_proj"].astype(jnp.bfloat16)        # (nx, nx)
    b_attn = params["b_attn"].reshape(1, 3 * nx).astype(jnp.float32)
    b_proj = params["b_proj"].reshape(1, nx).astype(jnp.float32)

    kernel = functools.partial(fused_masked_attention_kernel,
                               n_head=n_head, scale=scale)

    return pl.pallas_call(
        kernel,
        out_shape=jax.ShapeDtypeStruct((B, S, nx), jnp.float32),
        grid=(B,),
        in_specs=[
            pl.BlockSpec((1, S, nx), lambda b: (b, 0, 0)),       # x
            pl.BlockSpec((nx, 3 * nx), lambda b: (0, 0)),        # W_attn
            pl.BlockSpec((1, 3 * nx), lambda b: (0, 0)),         # b_attn
            pl.BlockSpec((nx, nx), lambda b: (0, 0)),            # W_proj
            pl.BlockSpec((1, nx), lambda b: (0, 0)),             # b_proj
        ],
        out_specs=pl.BlockSpec((1, S, nx), lambda b: (b, 0, 0)),
        compiler_params=pltpu.CompilerParams(
            dimension_semantics=("parallel",)),
    )(x, w_attn, b_attn, w_proj, b_proj)


# -------------------------------- Reference --------------------------------- #

def reference_forward(x, params, *, n_head, scale=False):
    """Pure-JAX f32 reference matching the PyTorch module semantics."""
    B, S, nx = x.shape
    D = nx // n_head
    qkv = jnp.einsum("bsi,io->bso", x, params["w_attn"]) + params["b_attn"]
    q, k, v = jnp.split(qkv, 3, axis=-1)
    sh = lambda t: t.reshape(B, S, n_head, D).transpose(0, 2, 1, 3)
    q, k, v = sh(q), sh(k), sh(v)
    w = jnp.einsum("bhqd,bhkd->bhqk", q, k)
    if scale:
        w = w / jnp.float32(D) ** 0.5
    mask = jnp.tril(jnp.ones((S, S)))
    w = jnp.where(mask > 0, w, -10000.0)
    w = jax.nn.softmax(w, axis=-1)
    a = jnp.einsum("bhqk,bhkd->bhqd", w, v)
    a = a.transpose(0, 2, 1, 3).reshape(B, S, nx)
    return jnp.einsum("bsi,io->bso", a, params["w_proj"]) + params["b_proj"]


# ----------------------------------- Main ------------------------------------ #

if __name__ == "__main__":
    # Small config consistent with the module: nx=32, n_ctx=seq=8, n_head=4
    B, S, NX, N_HEAD = 2, 8, 32, 4

    key = jax.random.PRNGKey(0)
    kx, kw1, kw2 = jax.random.split(key, 3)

    x = jax.random.normal(kx, (B, S, NX), dtype=jnp.float32)

    # Conv1D init (HF convention): weight ~ N(0, 0.02), bias = 0
    params = {
        "w_attn": 0.02 * jax.random.normal(kw1, (NX, 3 * NX), dtype=jnp.float32),
        "b_attn": jnp.zeros((3 * NX,), dtype=jnp.float32),
        "w_proj": 0.02 * jax.random.normal(kw2, (NX, NX), dtype=jnp.float32),
        "b_proj": jnp.zeros((NX,), dtype=jnp.float32),
    }

    # scale=False is the module default; also exercise the scale=True path.
    for scale in (False, True):
        out = masked_attention_forward(x, params, n_head=N_HEAD, scale=scale)
        out = jax.block_until_ready(out)
        ref = reference_forward(x, params, n_head=N_HEAD, scale=scale)
        assert out.shape == (B, S, NX)
        # bf16 MXU inputs + approx reciprocal -> compare vs f32 reference with
        # bf16-appropriate tolerances.
        assert jnp.allclose(out, ref, atol=2e-3, rtol=2e-2), \
            f"mismatch vs reference (scale={scale})"

    print("KERNEL_OK")
</pallas_src>

<mosaic_0001>
module attributes {stable_mosaic.version = 11 : i64} {
  func.func @fused_masked_attention_kernel(%arg0: i32, %arg1: memref<1x8x32xf32, #tpu.memory_space<vmem>>, %arg2: memref<32x96xbf16, #tpu.memory_space<vmem>>, %arg3: memref<1x96xf32, #tpu.memory_space<vmem>>, %arg4: memref<32x32xbf16, #tpu.memory_space<vmem>>, %arg5: memref<1x32xf32, #tpu.memory_space<vmem>>, %arg6: memref<1x8x32xf32, #tpu.memory_space<vmem>>) attributes {dimension_semantics = [#tpu.dimension_semantics<parallel>], iteration_bounds = array<i64: 2>, scalar_prefetch = 0 : i64, scratch_operands = 0 : i64, tpu.core_type = #tpu.core_type<tc>, window_params = [{transform_indices = @transform_0, window_bounds = array<i64: 1, 8, 32>}, {pipeline_mode = #tpu.pipeline_mode<synchronous>, transform_indices = @transform_1, window_bounds = array<i64: 32, 96>}, {pipeline_mode = #tpu.pipeline_mode<synchronous>, transform_indices = @transform_2, window_bounds = array<i64: 1, 96>}, {pipeline_mode = #tpu.pipeline_mode<synchronous>, transform_indices = @transform_3, window_bounds = array<i64: 32, 32>}, {pipeline_mode = #tpu.pipeline_mode<synchronous>, transform_indices = @transform_4, window_bounds = array<i64: 1, 32>}, {transform_indices = @transform_5, window_bounds = array<i64: 1, 8, 32>}]} {
    %c0 = arith.constant 0 : index
    %c0_0 = arith.constant 0 : index
    %c0_1 = arith.constant 0 : index
    %0 = vector.load %arg1[%c0, %c0_0, %c0_1] : memref<1x8x32xf32, #tpu.memory_space<vmem>>, vector<1x8x32xf32>
    %1 = vector.shape_cast %0 : vector<1x8x32xf32> to vector<8x32xf32>
    %2 = arith.truncf %1 : vector<8x32xf32> to vector<8x32xbf16>
    %c0_2 = arith.constant 0 : index
    %c0_3 = arith.constant 0 : index
    %3 = vector.load %arg2[%c0_2, %c0_3] : memref<32x96xbf16, #tpu.memory_space<vmem>>, vector<32x96xbf16>
    %cst = arith.constant dense<0.000000e+00> : vector<8x96xf32>
    %4 = tpu.matmul %2, %3, %cst {dimension_numbers = #tpu.dot_dimension_numbers<[1], [0], [0], [1], [0, 0, 1, 1], [], []>} : vector<8x32xbf16>, vector<32x96xbf16>, vector<8x96xf32> -> vector<8x96xf32>
    %c0_4 = arith.constant 0 : index
    %c0_5 = arith.constant 0 : index
    %5 = vector.load %arg3[%c0_4, %c0_5] : memref<1x96xf32, #tpu.memory_space<vmem>>, vector<1x96xf32>
    %6 = vector.broadcast %5 : vector<1x96xf32> to vector<8x96xf32>
    %7 = arith.addf %4, %6 : vector<8x96xf32>
    %8 = tpu.iota {dimensions = array<i32: 0>} : vector<8x8xi32>
    %9 = tpu.iota {dimensions = array<i32: 1>} : vector<8x8xi32>
    %10 = arith.cmpi sge, %8, %9 : vector<8x8xi32>
    %c0_6 = arith.constant 0 : index
    %c0_7 = arith.constant 0 : index
    %11 = vector.load %arg4[%c0_6, %c0_7] : memref<32x32xbf16, #tpu.memory_space<vmem>>, vector<32x32xbf16>
    %cst_8 = arith.constant 0.000000e+00 : f32
    %12 = vector.broadcast %cst_8 : f32 to vector<8x32xf32>
    %13 = vector.extract_strided_slice %7 {offsets = [0, 0], sizes = [8, 8], strides = [1, 1]} : vector<8x96xf32> to vector<8x8xf32>
    %14 = vector.extract_strided_slice %7 {offsets = [0, 32], sizes = [8, 8], strides = [1, 1]} : vector<8x96xf32> to vector<8x8xf32>
    %15 = vector.extract_strided_slice %7 {offsets = [0, 64], sizes = [8, 8], strides = [1, 1]} : vector<8x96xf32> to vector<8x8xf32>
    %16 = arith.truncf %13 : vector<8x8xf32> to vector<8x8xbf16>
    %17 = arith.truncf %14 : vector<8x8xf32> to vector<8x8xbf16>
    %cst_9 = arith.constant dense<0.000000e+00> : vector<8x8xf32>
    %18 = tpu.matmul %16, %17, %cst_9 {dimension_numbers = #tpu.dot_dimension_numbers<[1], [1], [0], [0], [0, 0, 1, 0], [], []>} : vector<8x8xbf16>, vector<8x8xbf16>, vector<8x8xf32> -> vector<8x8xf32>
    %cst_10 = arith.constant -1.000000e+04 : f32
    %19 = vector.broadcast %cst_10 : f32 to vector<8x8xf32>
    %20 = arith.select %10, %18, %19 : vector<8x8xi1>, vector<8x8xf32>
    %cst_11 = arith.constant dense<0xFF800000> : vector<8xf32>
    %21 = vector.multi_reduction <maximumf>, %20, %cst_11 [1] : vector<8x8xf32> to vector<8xf32>
    %22 = vector.shape_cast %21 : vector<8xf32> to vector<8x1xf32>
    %23 = vector.broadcast %22 : vector<8x1xf32> to vector<8x8xf32>
    %24 = arith.subf %20, %23 : vector<8x8xf32>
    %25 = math.exp %24 : vector<8x8xf32>
    %cst_12 = arith.constant dense<0.000000e+00> : vector<8xf32>
    %26 = vector.multi_reduction <add>, %25, %cst_12 [1] : vector<8x8xf32> to vector<8xf32>
    %27 = vector.shape_cast %26 : vector<8xf32> to vector<8x1xf32>
    %28 = tpu.reciprocal %27 {approx = true} : vector<8x1xf32> -> vector<8x1xf32>
    %29 = arith.truncf %25 : vector<8x8xf32> to vector<8x8xbf16>
    %30 = arith.truncf %15 : vector<8x8xf32> to vector<8x8xbf16>
    %cst_13 = arith.constant dense<0.000000e+00> : vector<8x8xf32>
    %31 = tpu.matmul %29, %30, %cst_13 {dimension_numbers = #tpu.dot_dimension_numbers<[1], [0], [0], [1], [0, 0, 1, 1], [], []>} : vector<8x8xbf16>, vector<8x8xbf16>, vector<8x8xf32> -> vector<8x8xf32>
    %32 = vector.broadcast %28 : vector<8x1xf32> to vector<8x8xf32>
    %33 = arith.mulf %31, %32 : vector<8x8xf32>
    %34 = arith.truncf %33 : vector<8x8xf32> to vector<8x8xbf16>
    %35 = vector.extract_strided_slice %11 {offsets = [0, 0], sizes = [8, 32], strides = [1, 1]} : vector<32x32xbf16> to vector<8x32xbf16>
    %cst_14 = arith.constant dense<0.000000e+00> : vector<8x32xf32>
    %36 = tpu.matmul %34, %35, %cst_14 {dimension_numbers = #tpu.dot_dimension_numbers<[1], [0], [0], [1], [0, 0, 1, 1], [], []>} : vector<8x8xbf16>, vector<8x32xbf16>, vector<8x32xf32> -> vector<8x32xf32>
    %37 = arith.addf %12, %36 : vector<8x32xf32>
    %38 = vector.extract_strided_slice %7 {offsets = [0, 8], sizes = [8, 8], strides = [1, 1]} : vector<8x96xf32> to vector<8x8xf32>
    %39 = vector.extract_strided_slice %7 {offsets = [0, 40], sizes = [8, 8], strides = [1, 1]} : vector<8x96xf32> to vector<8x8xf32>
    %40 = vector.extract_strided_slice %7 {offsets = [0, 72], sizes = [8, 8], strides = [1, 1]} : vector<8x96xf32> to vector<8x8xf32>
    %41 = arith.truncf %38 : vector<8x8xf32> to vector<8x8xbf16>
    %42 = arith.truncf %39 : vector<8x8xf32> to vector<8x8xbf16>
    %cst_15 = arith.constant dense<0.000000e+00> : vector<8x8xf32>
    %43 = tpu.matmul %41, %42, %cst_15 {dimension_numbers = #tpu.dot_dimension_numbers<[1], [1], [0], [0], [0, 0, 1, 0], [], []>} : vector<8x8xbf16>, vector<8x8xbf16>, vector<8x8xf32> -> vector<8x8xf32>
    %cst_16 = arith.constant -1.000000e+04 : f32
    %44 = vector.broadcast %cst_16 : f32 to vector<8x8xf32>
    %45 = arith.select %10, %43, %44 : vector<8x8xi1>, vector<8x8xf32>
    %cst_17 = arith.constant dense<0xFF800000> : vector<8xf32>
    %46 = vector.multi_reduction <maximumf>, %45, %cst_17 [1] : vector<8x8xf32> to vector<8xf32>
    %47 = vector.shape_cast %46 : vector<8xf32> to vector<8x1xf32>
    %48 = vector.broadcast %47 : vector<8x1xf32> to vector<8x8xf32>
    %49 = arith.subf %45, %48 : vector<8x8xf32>
    %50 = math.exp %49 : vector<8x8xf32>
    %cst_18 = arith.constant dense<0.000000e+00> : vector<8xf32>
    %51 = vector.multi_reduction <add>, %50, %cst_18 [1] : vector<8x8xf32> to vector<8xf32>
    %52 = vector.shape_cast %51 : vector<8xf32> to vector<8x1xf32>
    %53 = tpu.reciprocal %52 {approx = true} : vector<8x1xf32> -> vector<8x1xf32>
    %54 = arith.truncf %50 : vector<8x8xf32> to vector<8x8xbf16>
    %55 = arith.truncf %40 : vector<8x8xf32> to vector<8x8xbf16>
    %cst_19 = arith.constant dense<0.000000e+00> : vector<8x8xf32>
    %56 = tpu.matmul %54, %55, %cst_19 {dimension_numbers = #tpu.dot_dimension_numbers<[1], [0], [0], [1], [0, 0, 1, 1], [], []>} : vector<8x8xbf16>, vector<8x8xbf16>, vector<8x8xf32> -> vector<8x8xf32>
    %57 = vector.broadcast %53 : vector<8x1xf32> to vector<8x8xf32>
    %58 = arith.mulf %56, %57 : vector<8x8xf32>
    %59 = arith.truncf %58 : vector<8x8xf32> to vector<8x8xbf16>
    %60 = vector.extract_strided_slice %11 {offsets = [8, 0], sizes = [8, 32], strides = [1, 1]} : vector<32x32xbf16> to vector<8x32xbf16>
    %cst_20 = arith.constant dense<0.000000e+00> : vector<8x32xf32>
    %61 = tpu.matmul %59, %60, %cst_20 {dimension_numbers = #tpu.dot_dimension_numbers<[1], [0], [0], [1], [0, 0, 1, 1], [], []>} : vector<8x8xbf16>, vector<8x32xbf16>, vector<8x32xf32> -> vector<8x32xf32>
    %62 = arith.addf %37, %61 : vector<8x32xf32>
    %63 = vector.extract_strided_slice %7 {offsets = [0, 16], sizes = [8, 8], strides = [1, 1]} : vector<8x96xf32> to vector<8x8xf32>
    %64 = vector.extract_strided_slice %7 {offsets = [0, 48], sizes = [8, 8], strides = [1, 1]} : vector<8x96xf32> to vector<8x8xf32>
    %65 = vector.extract_strided_slice %7 {offsets = [0, 80], sizes = [8, 8], strides = [1, 1]} : vector<8x96xf32> to vector<8x8xf32>
    %66 = arith.truncf %63 : vector<8x8xf32> to vector<8x8xbf16>
    %67 = arith.truncf %64 : vector<8x8xf32> to vector<8x8xbf16>
    %cst_21 = arith.constant dense<0.000000e+00> : vector<8x8xf32>
    %68 = tpu.matmul %66, %67, %cst_21 {dimension_numbers = #tpu.dot_dimension_numbers<[1], [1], [0], [0], [0, 0, 1, 0], [], []>} : vector<8x8xbf16>, vector<8x8xbf16>, vector<8x8xf32> -> vector<8x8xf32>
    %cst_22 = arith.constant -1.000000e+04 : f32
    %69 = vector.broadcast %cst_22 : f32 to vector<8x8xf32>
    %70 = arith.select %10, %68, %69 : vector<8x8xi1>, vector<8x8xf32>
    %cst_23 = arith.constant dense<0xFF800000> : vector<8xf32>
    %71 = vector.multi_reduction <maximumf>, %70, %cst_23 [1] : vector<8x8xf32> to vector<8xf32>
    %72 = vector.shape_cast %71 : vector<8xf32> to vector<8x1xf32>
    %73 = vector.broadcast %72 : vector<8x1xf32> to vector<8x8xf32>
    %74 = arith.subf %70, %73 : vector<8x8xf32>
    %75 = math.exp %74 : vector<8x8xf32>
    %cst_24 = arith.constant dense<0.000000e+00> : vector<8xf32>
    %76 = vector.multi_reduction <add>, %75, %cst_24 [1] : vector<8x8xf32> to vector<8xf32>
    %77 = vector.shape_cast %76 : vector<8xf32> to vector<8x1xf32>
    %78 = tpu.reciprocal %77 {approx = true} : vector<8x1xf32> -> vector<8x1xf32>
    %79 = arith.truncf %75 : vector<8x8xf32> to vector<8x8xbf16>
    %80 = arith.truncf %65 : vector<8x8xf32> to vector<8x8xbf16>
    %cst_25 = arith.constant dense<0.000000e+00> : vector<8x8xf32>
    %81 = tpu.matmul %79, %80, %cst_25 {dimension_numbers = #tpu.dot_dimension_numbers<[1], [0], [0], [1], [0, 0, 1, 1], [], []>} : vector<8x8xbf16>, vector<8x8xbf16>, vector<8x8xf32> -> vector<8x8xf32>
    %82 = vector.broadcast %78 : vector<8x1xf32> to vector<8x8xf32>
    %83 = arith.mulf %81, %82 : vector<8x8xf32>
    %84 = arith.truncf %83 : vector<8x8xf32> to vector<8x8xbf16>
    %85 = vector.extract_strided_slice %11 {offsets = [16, 0], sizes = [8, 32], strides = [1, 1]} : vector<32x32xbf16> to vector<8x32xbf16>
    %cst_26 = arith.constant dense<0.000000e+00> : vector<8x32xf32>
    %86 = tpu.matmul %84, %85, %cst_26 {dimension_numbers = #tpu.dot_dimension_numbers<[1], [0], [0], [1], [0, 0, 1, 1], [], []>} : vector<8x8xbf16>, vector<8x32xbf16>, vector<8x32xf32> -> vector<8x32xf32>
    %87 = arith.addf %62, %86 : vector<8x32xf32>
    %88 = vector.extract_strided_slice %7 {offsets = [0, 24], sizes = [8, 8], strides = [1, 1]} : vector<8x96xf32> to vector<8x8xf32>
    %89 = vector.extract_strided_slice %7 {offsets = [0, 56], sizes = [8, 8], strides = [1, 1]} : vector<8x96xf32> to vector<8x8xf32>
    %90 = vector.extract_strided_slice %7 {offsets = [0, 88], sizes = [8, 8], strides = [1, 1]} : vector<8x96xf32> to vector<8x8xf32>
    %91 = arith.truncf %88 : vector<8x8xf32> to vector<8x8xbf16>
    %92 = arith.truncf %89 : vector<8x8xf32> to vector<8x8xbf16>
    %cst_27 = arith.constant dense<0.000000e+00> : vector<8x8xf32>
    %93 = tpu.matmul %91, %92, %cst_27 {dimension_numbers = #tpu.dot_dimension_numbers<[1], [1], [0], [0], [0, 0, 1, 0], [], []>} : vector<8x8xbf16>, vector<8x8xbf16>, vector<8x8xf32> -> vector<8x8xf32>
    %cst_28 = arith.constant -1.000000e+04 : f32
    %94 = vector.broadcast %cst_28 : f32 to vector<8x8xf32>
    %95 = arith.select %10, %93, %94 : vector<8x8xi1>, vector<8x8xf32>
    %cst_29 = arith.constant dense<0xFF800000> : vector<8xf32>
    %96 = vector.multi_reduction <maximumf>, %95, %cst_29 [1] : vector<8x8xf32> to vector<8xf32>
    %97 = vector.shape_cast %96 : vector<8xf32> to vector<8x1xf32>
    %98 = vector.broadcast %97 : vector<8x1xf32> to vector<8x8xf32>
    %99 = arith.subf %95, %98 : vector<8x8xf32>
    %100 = math.exp %99 : vector<8x8xf32>
    %cst_30 = arith.constant dense<0.000000e+00> : vector<8xf32>
    %101 = vector.multi_reduction <add>, %100, %cst_30 [1] : vector<8x8xf32> to vector<8xf32>
    %102 = vector.shape_cast %101 : vector<8xf32> to vector<8x1xf32>
    %103 = tpu.reciprocal %102 {approx = true} : vector<8x1xf32> -> vector<8x1xf32>
    %104 = arith.truncf %100 : vector<8x8xf32> to vector<8x8xbf16>
    %105 = arith.truncf %90 : vector<8x8xf32> to vector<8x8xbf16>
    %cst_31 = arith.constant dense<0.000000e+00> : vector<8x8xf32>
    %106 = tpu.matmul %104, %105, %cst_31 {dimension_numbers = #tpu.dot_dimension_numbers<[1], [0], [0], [1], [0, 0, 1, 1], [], []>} : vector<8x8xbf16>, vector<8x8xbf16>, vector<8x8xf32> -> vector<8x8xf32>
    %107 = vector.broadcast %103 : vector<8x1xf32> to vector<8x8xf32>
    %108 = arith.mulf %106, %107 : vector<8x8xf32>
    %109 = arith.truncf %108 : vector<8x8xf32> to vector<8x8xbf16>
    %110 = vector.extract_strided_slice %11 {offsets = [24, 0], sizes = [8, 32], strides = [1, 1]} : vector<32x32xbf16> to vector<8x32xbf16>
    %cst_32 = arith.constant dense<0.000000e+00> : vector<8x32xf32>
    %111 = tpu.matmul %109, %110, %cst_32 {dimension_numbers = #tpu.dot_dimension_numbers<[1], [0], [0], [1], [0, 0, 1, 1], [], []>} : vector<8x8xbf16>, vector<8x32xbf16>, vector<8x32xf32> -> vector<8x32xf32>
    %112 = arith.addf %87, %111 : vector<8x32xf32>
    %c0_33 = arith.constant 0 : index
    %c0_34 = arith.constant 0 : index
    %113 = vector.load %arg5[%c0_33, %c0_34] : memref<1x32xf32, #tpu.memory_space<vmem>>, vector<1x32xf32>
    %114 = vector.broadcast %113 : vector<1x32xf32> to vector<8x32xf32>
    %115 = arith.addf %112, %114 : vector<8x32xf32>
    %c0_35 = arith.constant 0 : index
    %c0_36 = arith.constant 0 : index
    %c0_37 = arith.constant 0 : index
    %116 = vector.load %arg6[%c0_35, %c0_36, %c0_37] : memref<1x8x32xf32, #tpu.memory_space<vmem>>, vector<1x8x32xf32>
    %117 = vector.shape_cast %116 : vector<1x8x32xf32> to vector<8x32xf32>
    %118 = vector.shape_cast %115 : vector<8x32xf32> to vector<1x8x32xf32>
    tpu.vector_store %arg6[%c0_35, %c0_36, %c0_37], %118 {strides = array<i32>} : memref<1x8x32xf32, #tpu.memory_space<vmem>>, vector<1x8x32xf32>,
    return
  }
  func.func @transform_0(%arg0: i32) -> (i32, i32, i32) {
    %c0_i32 = arith.constant 0 : i32
    %c0_i32_0 = arith.constant 0 : i32
    %c0_i32_1 = arith.constant 0 : i32
    return %arg0, %c0_i32, %c0_i32_0 : i32, i32, i32
  }
  func.func @transform_1(%arg0: i32) -> (i32, i32) {
    %c0_i32 = arith.constant 0 : i32
    %c0_i32_0 = arith.constant 0 : i32
    %c0_i32_1 = arith.constant 0 : i32
    return %c0_i32, %c0_i32_0 : i32, i32
  }
  func.func @transform_2(%arg0: i32) -> (i32, i32) {
    %c0_i32 = arith.constant 0 : i32
    %c0_i32_0 = arith.constant 0 : i32
    %c0_i32_1 = arith.constant 0 : i32
    return %c0_i32, %c0_i32_0 : i32, i32
  }
  func.func @transform_3(%arg0: i32) -> (i32, i32) {
    %c0_i32 = arith.constant 0 : i32
    %c0_i32_0 = arith.constant 0 : i32
    %c0_i32_1 = arith.constant 0 : i32
    return %c0_i32, %c0_i32_0 : i32, i32
  }
  func.func @transform_4(%arg0: i32) -> (i32, i32) {
    %c0_i32 = arith.constant 0 : i32
    %c0_i32_0 = arith.constant 0 : i32
    %c0_i32_1 = arith.constant 0 : i32
    return %c0_i32, %c0_i32_0 : i32, i32
  }
  func.func @transform_5(%arg0: i32) -> (i32, i32, i32) {
    %c0_i32 = arith.constant 0 : i32
    %c0_i32_0 = arith.constant 0 : i32
    %c0_i32_1 = arith.constant 0 : i32
    return %arg0, %c0_i32, %c0_i32_0 : i32, i32, i32
  }
}

</mosaic_0001>

<llo_original>
// kernel: tpu_custom_call.1
$region0: #{tpu_custom_call.1}
  #allocation0 [shape = 'u32[]', space=smem, size = 0x4, offset = 0x4, fixed_abs, tag = 'smem constant byte address 0x4 - core index']
  #allocation1 [shape = 'u32[144,128]{1,0:T(1,128)}', space=vmem, size = 0x12000, scoped, tag = 'internal scratch']
  %s0 = inlined_call_operand.hbm [shape: f32[2,8,32], index: 0, kind: input, shape index: {}]
  %s1 = inlined_call_operand.hbm [shape: bf16[32,96], index: 1, kind: input, shape index: {}]
  %s2 = inlined_call_operand.vmem [shape: f32[1,96], index: 2, kind: input, shape index: {}]
  %s3 = inlined_call_operand.hbm [shape: bf16[32,32], index: 3, kind: input, shape index: {}]
  %s4 = inlined_call_operand.vmem [shape: f32[1,32], index: 4, kind: input, shape index: {}]
  %s5 = inlined_call_operand.hbm [shape: f32[2,8,32], index: 5, kind: output, shape index: {}]
  %s6 = sld [smem:[#allocation0]]
  $region65: #{tpu_custom_call.1} parent=0
    _
  %s8 = ssub.s32 1, %s6
  %s9 = scalar_select 0, %s8, %s6
  $region1: #{tpu_custom_call.1} parent=0
    #allocation2 [shape = 'u8[8192]{0}', space=vmem, size = 0x2000, scoped, tag = 'input window, operand 0']
    #allocation3 [shape = 's32[2]{0}', space=sflag, size = 0x8, scoped, tag = 'scoped memory for tpu_custom_call.1']
    #allocation4 [shape = 's32[2]{0}', space=sflag, size = 0x8, scoped, tag = 'scoped memory for tpu_custom_call.1']
    #allocation5 [shape = 'u8[8192]{0}', space=vmem, size = 0x2000, scoped, tag = 'input window, operand 1, single buffered']
    #allocation6 [shape = 's32[1]{0}', space=sflag, size = 0x4, scoped, tag = 'scoped memory for tpu_custom_call.1']
    #allocation7 [shape = 'u8[8192]{0}', space=vmem, size = 0x2000, scoped, tag = 'input window, operand 3, single buffered']
    #allocation8 [shape = 'u8[8192]{0}', space=vmem, size = 0x2000, scoped, tag = 'output window, operand 0']
    %10 = vsyncpa [#allocation3], 0
    %s11 = scalar_lea.sflag [#allocation3], 1
    %12 = vsyncpa %s11, 0
    %13 = vsyncpa [#allocation6], 0
    %14 = vsyncpa [#allocation4], 0
    %s15 = scalar_lea.sflag [#allocation4], 1
    %16 = vsyncpa %s15, 0
    loop: start=0, step=1, limit=4
    $region2: #{tpu_custom_call.1} parent=1 // loop_pre_header
      _
    $region3: #{tpu_custom_call.1} parent=1 // loop_header
      %s18 = sphi 0, %s22
      %p19 = scmp.ge.s32.totalorder %s18, 4
      %s28 = sphi 0, %s30
      %s31 = sphi 0, %s28
      %s32 = sphi 0, %s31
      %s48 = sphi 0, %s32
      %s52 = sphi 0, %s52
      %s54 = sphi 0, %s52
      %s55 = sphi 0, %s54
      %s69 = sphi 0, %s55
      %s73 = sphi 0, %s73
      %s75 = sphi 0, %s73
      %s76 = sphi 0, %s75
      %s90 = sphi 0, %s76
      %s94 = sphi 0, %s94
      %s96 = sphi 0, %s94
      %s97 = sphi 0, %s96
      %s111 = sphi 0, %s97
      %s115 = sphi 0, %s115
      %s117 = sphi 0, %s115
      %s118 = sphi 0, %s117
      %s132 = sphi 0, %s118
      %s138 = sphi 0, %s140
      %s141 = sphi 0, %s138
      %s142 = sphi 0, %s141
      %s158 = sphi 0, %s142
    $region4: #{tpu_custom_call.1} parent=1 // loop_header_branch
      %21 = sbr.rel (%p19) target = $region8
    $region5: #{tpu_custom_call.1} parent=1 // loop_body
      %s23 = ssub.s32 %s18, 1
      %s24 = ssub.s32 %s18, 2
      %s25 = sadd.s32 %s18, 1
      %s26 = ssub.s32 %s18, %s25
      %p27 = scmp.eq.s32.totalorder %s26, 0
      %s29 = sadd.s32 %s28, 1
      %s30 = scalar_select %p27, %s28, %s29
      %p33 = pneg %p27
      %p34 = scmp.eq.s32.totalorder %s18, 1
      %p35 = por %p33, %p34
      %p36 = scmp.ne.s32.totalorder %s28, %s31
      %p37 = scmp.eq.s32.totalorder %s18, 0
      %p38 = por %p36, %p37
      %p39 = scmp.ne.s32.totalorder %s28, %s31
      %p40 = scmp.eq.s32.totalorder %s23, 1
      %p41 = por %p39, %p40
      %p42 = scmp.ne.s32.totalorder %s31, %s32
      %p43 = scmp.eq.s32.totalorder %s23, 0
      %p44 = por %p42, %p43
      %p45 = scmp.ne.s32.totalorder %s31, %s32
      %p46 = scmp.eq.s32.totalorder %s24, 1
      %p47 = por %p45, %p46
      %p49 = scmp.ne.s32.totalorder %s32, %s48
      %p50 = scmp.eq.s32.totalorder %s24, 0
      %p51 = por %p49, %p50
      %s53 = sadd.s32 %s52, 1
      %p56 = scmp.eq.s32.totalorder %s18, 1
      %p57 = scmp.ne.s32.totalorder %s52, %s54
      %p58 = scmp.eq.s32.totalorder %s18, 0
      %p59 = por %p57, %p58
      %p60 = scmp.ne.s32.totalorder %s52, %s54
      %p61 = scmp.eq.s32.totalorder %s23, 1
      %p62 = por %p60, %p61
      %p63 = scmp.ne.s32.totalorder %s54, %s55
      %p64 = scmp.eq.s32.totalorder %s23, 0
      %p65 = por %p63, %p64
      %p66 = scmp.ne.s32.totalorder %s54, %s55
      %p67 = scmp.eq.s32.totalorder %s24, 1
      %p68 = por %p66, %p67
      %p70 = scmp.ne.s32.totalorder %s55, %s69
      %p71 = scmp.eq.s32.totalorder %s24, 0
      %p72 = por %p70, %p71
      %s74 = sadd.s32 %s73, 1
      %p77 = scmp.eq.s32.totalorder %s18, 1
      %p78 = scmp.ne.s32.totalorder %s73, %s75
      %p79 = scmp.eq.s32.totalorder %s18, 0
      %p80 = por %p78, %p79
      %p81 = scmp.ne.s32.totalorder %s73, %s75
      %p82 = scmp.eq.s32.totalorder %s23, 1
      %p83 = por %p81, %p82
      %p84 = scmp.ne.s32.totalorder %s75, %s76
      %p85 = scmp.eq.s32.totalorder %s23, 0
      %p86 = por %p84, %p85
      %p87 = scmp.ne.s32.totalorder %s75, %s76
      %p88 = scmp.eq.s32.totalorder %s24, 1
      %p89 = por %p87, %p88
      %p91 = scmp.ne.s32.totalorder %s76, %s90
      %p92 = scmp.eq.s32.totalorder %s24, 0
      %p93 = por %p91, %p92
      %s95 = sadd.s32 %s94, 1
      %p98 = scmp.eq.s32.totalorder %s18, 1
      %p99 = scmp.ne.s32.totalorder %s94, %s96
      %p100 = scmp.eq.s32.totalorder %s18, 0
      %p101 = por %p99, %p100
      %p102 = scmp.ne.s32.totalorder %s94, %s96
      %p103 = scmp.eq.s32.totalorder %s23, 1
      %p104 = por %p102, %p103
      %p105 = scmp.ne.s32.totalorder %s96, %s97
      %p106 = scmp.eq.s32.totalorder %s23, 0
      %p107 = por %p105, %p106
      %p108 = scmp.ne.s32.totalorder %s96, %s97
      %p109 = scmp.eq.s32.totalorder %s24, 1
      %p110 = por %p108, %p109
      %p112 = scmp.ne.s32.totalorder %s97, %s111
      %p113 = scmp.eq.s32.totalorder %s24, 0
      %p114 = por %p112, %p113
      %s116 = sadd.s32 %s115, 1
      %p119 = scmp.eq.s32.totalorder %s18, 1
      %p120 = scmp.ne.s32.totalorder %s115, %s117
      %p121 = scmp.eq.s32.totalorder %s18, 0
      %p122 = por %p120, %p121
      %p123 = scmp.ne.s32.totalorder %s115, %s117
      %p124 = scmp.eq.s32.totalorder %s23, 1
      %p125 = por %p123, %p124
      %p126 = scmp.ne.s32.totalorder %s117, %s118
      %p127 = scmp.eq.s32.totalorder %s23, 0
      %p128 = por %p126, %p127
      %p129 = scmp.ne.s32.totalorder %s117, %s118
      %p130 = scmp.eq.s32.totalorder %s24, 1
      %p131 = por %p129, %p130
      %p133 = scmp.ne.s32.totalorder %s118, %s132
      %p134 = scmp.eq.s32.totalorder %s24, 0
      %p135 = por %p133, %p134
      %s136 = ssub.s32 %s18, %s25
      %p137 = scmp.eq.s32.totalorder %s136, 0
      %s139 = sadd.s32 %s138, 1
      %s140 = scalar_select %p137, %s138, %s139
      %p143 = pneg %p137
      %p144 = scmp.eq.s32.totalorder %s18, 1
      %p145 = por %p143, %p144
      %p146 = scmp.ne.s32.totalorder %s138, %s141
      %p147 = scmp.eq.s32.totalorder %s18, 0
      %p148 = por %p146, %p147
      %p149 = scmp.ne.s32.totalorder %s138, %s141
      %p150 = scmp.eq.s32.totalorder %s23, 1
      %p151 = por %p149, %p150
      %p152 = scmp.ne.s32.totalorder %s141, %s142
      %p153 = scmp.eq.s32.totalorder %s23, 0
      %p154 = por %p152, %p153
      %p155 = scmp.ne.s32.totalorder %s141, %s142
      %p156 = scmp.eq.s32.totalorder %s24, 1
      %p157 = por %p155, %p156
      %p159 = scmp.ne.s32.totalorder %s142, %s158
      %p160 = scmp.eq.s32.totalorder %s24, 0
      %p161 = por %p159, %p160
      %p162 = scmp.le.s32.totalorder 1, %s18
      %p163 = scmp.lt.s32.totalorder %s18, 3
      %p164 = pnand %p162, %p163
      %p165 = pneg %p164
      // Predicated region
      $region9: #{tpu_custom_call.1} parent=5 // pred_check
        _
      $region10: #{tpu_custom_call.1} parent=5 // pred_check_branch
        %167 = sbr.rel (%p164) target = $region12
      $region11: #{tpu_custom_call.1} parent=5 // pred_region
        %s168 = ssub.s32 %s18, 1
        // Predicated region
        $region13: #{tpu_custom_call.1} parent=11 // pred_check
          %p169 = pneg %p65
        $region14: #{tpu_custom_call.1} parent=11 // pred_check_branch
          %171 = sbr.rel (%p169) target = $region16
        $region15: #{tpu_custom_call.1} parent=11 // pred_region
          %s173 = ssub.s32 256, 256
          %174 = vsyncadd [#allocation6], %s173
          %s175 = sshll.u32 [#allocation5], 4
          %s176 = int_to_ptr.vmem [resolvable:$true] %s175
          %181 = dma.hbm_to_vmem [thread:$0]  %s1, 256, %s176, [#allocation6], 64, 64, 4
        $region16: #{tpu_custom_call.1} parent=11 // pred_fallthru
          _
        // Predicated region
        $region17: #{tpu_custom_call.1} parent=11 // pred_check
          %p182 = pneg %p86
        $region18: #{tpu_custom_call.1} parent=11 // pred_check_branch
          %184 = sbr.rel (%p182) target = $region20
        $region19: #{tpu_custom_call.1} parent=11 // pred_region
          _
        $region20: #{tpu_custom_call.1} parent=11 // pred_fallthru
          _
        // Predicated region
        $region21: #{tpu_custom_call.1} parent=11 // pred_check
          %p185 = pneg %p107
        $region22: #{tpu_custom_call.1} parent=11 // pred_check_branch
          %187 = sbr.rel (%p185) target = $region24
        $region23: #{tpu_custom_call.1} parent=11 // pred_region
          %s189 = ssub.s32 256, 256
          %190 = vsyncadd [#allocation6], %s189
          %s191 = sshll.u32 [#allocation7], 4
          %s192 = int_to_ptr.vmem [resolvable:$true] %s191
          %197 = dma.hbm_to_vmem [thread:$0]  %s3, 256, %s192, [#allocation6], 64, 64, 4
        $region24: #{tpu_custom_call.1} parent=11 // pred_fallthru
          _
        // Predicated region
        $region25: #{tpu_custom_call.1} parent=11 // pred_check
          %p198 = pneg %p128
        $region26: #{tpu_custom_call.1} parent=11 // pred_check_branch
          %200 = sbr.rel (%p198) target = $region28
        $region27: #{tpu_custom_call.1} parent=11 // pred_region
          _
        $region28: #{tpu_custom_call.1} parent=11 // pred_fallthru
          _
      $region12: #{tpu_custom_call.1} parent=5 // pred_fallthru
        _
      %p201 = scmp.lt.s32.totalorder %s18, 2
      // Predicated region
      $region29: #{tpu_custom_call.1} parent=5 // pred_check
        %p202 = pneg %p201
      $region30: #{tpu_custom_call.1} parent=5 // pred_check_branch
        %204 = sbr.rel (%p202) target = $region32
      $region31: #{tpu_custom_call.1} parent=5 // pred_region
        // Predicated region
        $region33: #{tpu_custom_call.1} parent=31 // pred_check
          %p205 = pneg %p38
        $region34: #{tpu_custom_call.1} parent=31 // pred_check_branch
          %207 = sbr.rel (%p205) target = $region36
        $region35: #{tpu_custom_call.1} parent=31 // pred_region
          %s208 = sand.u32 %s28, 1
          %s209 = scalar_lea.sflag [#allocation3], %s208
          %s210 = sand.u32 %s28, 1
          %s211 = smul.addr %s210, 8
          %s212 = scalar_lea.vmem [#allocation2], %s211
          %s214 = ssub.s32 128, 128
          %215 = vsyncadd %s209, %s214
          %s216 = smul.addr %s18, 128
          %s217 = scalar_lea.hbm %s0, %s216
          %s219 = sshll.u32 %s212, 4
          %s220 = int_to_ptr.vmem [resolvable:$true] %s219
          %222 = dma.hbm_to_vmem [thread:$0]  %s217, 128, %s220, %s209
        $region36: #{tpu_custom_call.1} parent=31 // pred_fallthru
          _
      $region32: #{tpu_custom_call.1} parent=5 // pred_fallthru
        _
      %p223 = scmp.le.s32.totalorder 1, %s18
      %p224 = scmp.lt.s32.totalorder %s18, 3
      %p225 = pnand %p223, %p224
      %p226 = pneg %p225
      // Predicated region
      $region37: #{tpu_custom_call.1} parent=5 // pred_check
        _
      $region38: #{tpu_custom_call.1} parent=5 // pred_check_branch
        %228 = sbr.rel (%p225) target = $region40
      $region39: #{tpu_custom_call.1} parent=5 // pred_region
        %s229 = ssub.s32 %s18, 1
        %s230 = sand.u32 %s31, 1
        %s231 = scalar_lea.sflag [#allocation3], %s230
        %s232 = sand.u32 %s31, 1
        %s233 = smul.addr %s232, 8
        %s234 = scalar_lea.vmem [#allocation2], %s233
        // Predicated region
        $region41: #{tpu_custom_call.1} parent=39 // pred_check
          %p235 = pneg %p44
        $region42: #{tpu_custom_call.1} parent=39 // pred_check_branch
          %237 = sbr.rel (%p235) target = $region44
        $region43: #{tpu_custom_call.1} parent=39 // pred_region
          %238 = dma.done %s231, 128
        $region44: #{tpu_custom_call.1} parent=39 // pred_fallthru
          _
        // Predicated region
        $region45: #{tpu_custom_call.1} parent=39 // pred_check
          %p239 = pneg %p65
        $region46: #{tpu_custom_call.1} parent=39 // pred_check_branch
          %241 = sbr.rel (%p239) target = $region48
        $region47: #{tpu_custom_call.1} parent=39 // pred_region
          %242 = dma.done [#allocation6], 256
        $region48: #{tpu_custom_call.1} parent=39 // pred_fallthru
          _
        // Predicated region
        $region49: #{tpu_custom_call.1} parent=39 // pred_check
          %p243 = pneg %p107
        $region50: #{tpu_custom_call.1} parent=39 // pred_check_branch
          %245 = sbr.rel (%p243) target = $region52
        $region51: #{tpu_custom_call.1} parent=39 // pred_region
          %246 = dma.done [#allocation6], 256
        $region52: #{tpu_custom_call.1} parent=39 // pred_fallthru
          _
        %s247 = sand.u32 %s31, 1
        %s248 = scalar_lea.sflag [#allocation3], %s247
        %s249 = sand.u32 %s31, 1
        %s250 = smul.addr %s249, 8
        %s251 = scalar_lea.vmem [#allocation2], %s250
        %p252 = pneg %p44
        %p253 = pneg %p41
        %p254 = pneg %p65
        %p255 = pneg %p62
        %p256 = pneg %p86
        %p257 = pneg %p83
        %p258 = pneg %p107
        %p259 = pneg %p104
        %p260 = pneg %p128
        %p261 = pneg %p125
        %p262 = pneg %p154
        %p263 = pneg %p151
        %s264 = sand.u32 %s141, 1
        %s265 = scalar_lea.sflag [#allocation4], %s264
        %s266 = sand.u32 %s141, 1
        %s267 = smul.addr %s266, 8
        %s268 = scalar_lea.vmem [#allocation8], %s267
        %v270 = vld [vmem:[%s234] sm:$0xff]
        %v271 = vpack.c.bf16 %v270, %v270
        %v272 = vld [vmem:[#allocation5] sm:$0xf]
        %v273 = vld [vmem:[#allocation5 + $0x4] sm:$0xf]
        %v274 = vld [vmem:[#allocation5 + $0x8] sm:$0xf]
        %v275 = vld [vmem:[#allocation5 + $0xc] sm:$0xf]
        %v276 = vld [vmem:[%s2] sm:$0x1]
        %v278 = vlaneseq
        %v279 = vshrl.u32 %v278, 7
        %v280 = vsub.s32 0, %v279
        %v281 = vrot.slane %v276, %v280
        %v287 = vunpack.c.l.b16 %v272
        %v288 = vunpack.c.l.b16 %v273
        %v289 = vunpack.c.l.b16 %v274
        %v290 = vunpack.c.l.b16 %v275
        %v291 = vpack.c.b16 %v288, %v287
        %v292 = vpack.c.b16 %v290, %v289
        %vm295 = vcmask 261120
        %v297 = vsel %vm295, %v271, 0
        %299 = vmatprep.subr.bf16.mxu0 0
        %300 = vmatpush1.bf16.msra.mxu0 0
        %301 = vmatprep.subr.bf16.mxu0 0
        %302 = vmatpush1.bf16.msra.mxu0 0
        %303 = vmatprep.subr.bf16.mxu0 0
        %304 = vmatpush1.bf16.msra.mxu0 0
        %305 = vmatprep.subr.bf16.mxu0 0
        %306 = vmatpush1.bf16.msra.mxu0 0
        %307 = vmatprep.subr.bf16.mxu0 0
        %308 = vmatpush1.bf16.msra.mxu0 0
        %309 = vmatprep.subr.bf16.mxu0 0
        %310 = vmatpush1.bf16.msra.mxu0 0
        %311 = vmatprep.subr.bf16.mxu0 0
        %312 = vmatpush1.bf16.msra.mxu0 %v292
        %313 = vmatprep.subr.bf16.mxu0 0
        %314 = vmatpush1.bf16.msra.mxu0 %v291
        %315 = vmatprep.subr.bf16.mxu0 0
        %316 = vmatpush2.bf16.msra.mxu0 0
        %317 = vmatprep.subr.bf16.mxu0 0
        %318 = vmatpush2.bf16.msra.mxu0 0
        %319 = vmatprep.subr.bf16.mxu0 0
        %320 = vmatpush2.bf16.msra.mxu0 0
        %321 = vmatprep.subr.bf16.mxu0 0
        %322 = vmatpush2.bf16.msra.mxu0 0
        %323 = vmatprep.subr.bf16.mxu0 0
        %324 = vmatpush2.bf16.msra.mxu0 0
        %325 = vmatprep.subr.bf16.mxu0 0
        %326 = vmatpush2.bf16.msra.mxu0 0
        %327 = vmatprep.subr.bf16.mxu0 0
        %328 = vmatpush2.bf16.msra.mxu0 0
        %329 = vmatprep.subr.bf16.mxu0 0
        %330 = vmatpush2.bf16.msra.mxu0 0
        %331 = vmatprep.mubr.bf16.mxu0 0
        %332 = vmatmul.mubr.bf16.gmra.mxu0 %v297
        %v333 = vpop.f32.mrf.mxu0
        %v334 = vadd.f32 %v281, %v333
        %v335 = vpop.f32.mrf.mxu0
        %v336 = vpop.f32.mrf.mxu0
        %v337 = vpop.f32.mrf.mxu0
        %338 = vdwg.mxu0
        %v339 = vlaneseq
        %v340 = vshrl.u32 %v339, 7
        %v341 = vlaneseq
        %v342 = vand.u32 %v341, 127
        %vm343 = vcmp.ge.s32.totalorder %v340, %v342
        %v344 = vld [vmem:[#allocation7] sm:$0xf]
        %v345 = vld [vmem:[#allocation7 + $0x4] sm:$0xf]
        %v346 = vld [vmem:[#allocation7 + $0x8] sm:$0xf]
        %v347 = vld [vmem:[#allocation7 + $0xc] sm:$0xf]
        %v348 = vpack.c.bf16 %v334, %v334
        %350 = vrot.lane.b32.xlu0 %v348, 96
        %v351 = vpop.permute.xlu0 %350
        %vm352 = vcmask 64512
        %v354 = vsel %vm352, %v348, 0
        %v357 = vsel %vm352, %v351, 0
        %359 = vmatprep.subr.bf16.mxu0 0
        %360 = vmatpush1.bf16.xpose.msra.mxu0 0
        %361 = vmatprep.subr.bf16.mxu0 0
        %362 = vmatpush1.bf16.xpose.msra.mxu0 0
        %363 = vmatprep.subr.bf16.mxu0 0
        %364 = vmatpush1.bf16.xpose.msra.mxu0 0
        %365 = vmatprep.subr.bf16.mxu0 0
        %366 = vmatpush1.bf16.xpose.msra.mxu0 0
        %367 = vmatprep.subr.bf16.mxu0 0
        %368 = vmatpush1.bf16.xpose.msra.mxu0 0
        %369 = vmatprep.subr.bf16.mxu0 0
        %370 = vmatpush1.bf16.xpose.msra.mxu0 0
        %371 = vmatprep.subr.bf16.mxu0 0
        %372 = vmatpush1.bf16.xpose.msra.mxu0 0
        %373 = vmatprep.subr.bf16.mxu0 0
        %374 = vmatpush1.bf16.xpose.msra.mxu0 %v357
        %375 = vmatprep.subr.bf16.mxu0 0
        %376 = vmatpush2.bf16.xpose.msra.mxu0 0
        %377 = vmatprep.subr.bf16.mxu0 0
        %378 = vmatpush2.bf16.xpose.msra.mxu0 0
        %379 = vmatprep.subr.bf16.mxu0 0
        %380 = vmatpush2.bf16.xpose.msra.mxu0 0
        %381 = vmatprep.subr.bf16.mxu0 0
        %382 = vmatpush2.bf16.xpose.msra.mxu0 0
        %383 = vmatprep.subr.bf16.mxu0 0
        %384 = vmatpush2.bf16.xpose.msra.mxu0 0
        %385 = vmatprep.subr.bf16.mxu0 0
        %386 = vmatpush2.bf16.xpose.msra.mxu0 0
        %387 = vmatprep.subr.bf16.mxu0 0
        %388 = vmatpush2.bf16.xpose.msra.mxu0 0
        %389 = vmatprep.subr.bf16.mxu0 0
        %390 = vmatpush2.bf16.xpose.msra.mxu0 0
        %391 = vmatprep.mubr.bf16.mxu0 0
        %392 = vmatmul.mubr.bf16.gmra.mxu0 %v354
        %v393 = vpop.f32.mrf.mxu0
        %v394 = vadd.f32 0.0, %v393
        %v395 = vpop.f32.mrf.mxu0
        %v396 = vpop.f32.mrf.mxu0
        %v397 = vpop.f32.mrf.mxu0
        %398 = vdwg.mxu0
        %v399 = vsel %vm343, %v394, -10000.0
        %v400 = vsel %vm352, %v399, -inf
        %401 = vmax.xlane.f32.xlu0 %v400
        %v402 = vpop.xlane.xlu0 %401
        %v403 = vsub.f32 %v399, %v402
        %v404 = vmul.f32 %v403, 1.442695
        %v405 = vpow.pop %v404
        %v406 = vsel %vm352, %v405, 0.0
        %407 = vadd.xlane.f32.xlu0 %v406
        %v408 = vpop.xlane.xlu0 %407
        %v409 = vrcp.pop %v408
        %v410 = vpack.c.bf16 %v405, %v405
        %411 = vrot.lane.b32.xlu0 %v348, 64
        %v412 = vpop.permute.xlu0 %411
        %v414 = vsel %vm352, %v410, 0
        %vm416 = vcmask 1043456
        %v418 = vsel %vm416, %v412, 0
        %420 = vmatprep.subr.bf16.mxu0 0
        %421 = vmatpush1.bf16.msra.mxu0 0
        %422 = vmatprep.subr.bf16.mxu0 0
        %423 = vmatpush1.bf16.msra.mxu0 0
        %424 = vmatprep.subr.bf16.mxu0 0
        %425 = vmatpush1.bf16.msra.mxu0 0
        %426 = vmatprep.subr.bf16.mxu0 0
        %427 = vmatpush1.bf16.msra.mxu0 0
        %428 = vmatprep.subr.bf16.mxu0 0
        %429 = vmatpush1.bf16.msra.mxu0 0
        %430 = vmatprep.subr.bf16.mxu0 0
        %431 = vmatpush1.bf16.msra.mxu0 0
        %432 = vmatprep.subr.bf16.mxu0 0
        %433 = vmatpush1.bf16.msra.mxu0 0
        %434 = vmatprep.subr.bf16.mxu0 0
        %435 = vmatpush1.bf16.msra.mxu0 %v418
        %436 = vmatprep.subr.bf16.mxu0 0
        %437 = vmatpush2.bf16.msra.mxu0 0
        %438 = vmatprep.subr.bf16.mxu0 0
        %439 = vmatpush2.bf16.msra.mxu0 0
        %440 = vmatprep.subr.bf16.mxu0 0
        %441 = vmatpush2.bf16.msra.mxu0 0
        %442 = vmatprep.subr.bf16.mxu0 0
        %443 = vmatpush2.bf16.msra.mxu0 0
        %444 = vmatprep.subr.bf16.mxu0 0
        %445 = vmatpush2.bf16.msra.mxu0 0
        %446 = vmatprep.subr.bf16.mxu0 0
        %447 = vmatpush2.bf16.msra.mxu0 0
        %448 = vmatprep.subr.bf16.mxu0 0
        %449 = vmatpush2.bf16.msra.mxu0 0
        %450 = vmatprep.subr.bf16.mxu0 0
        %451 = vmatpush2.bf16.msra.mxu0 0
        %452 = vmatprep.mubr.bf16.mxu0 0
        %453 = vmatmul.mubr.bf16.gmra.mxu0 %v414
        %v454 = vpop.f32.mrf.mxu0
        %v455 = vadd.f32 0.0, %v454
        %v456 = vpop.f32.mrf.mxu0
        %v457 = vpop.f32.mrf.mxu0
        %v458 = vpop.f32.mrf.mxu0
        %459 = vdwg.mxu0
        %v460 = vmul.f32 %v455, %v409
        %v461 = vpack.c.bf16 %v460, %v460
        %462 = vrot.lane.b32.xlu0 %v348, 120
        %v463 = vpop.permute.xlu0 %462
        %464 = vrot.lane.b32.xlu0 %v348, 88
        %v465 = vpop.permute.xlu0 %464
        %v467 = vsel %vm352, %v463, 0
        %v470 = vsel %vm352, %v465, 0
        %472 = vmatprep.subr.bf16.mxu0 0
        %473 = vmatpush1.bf16.xpose.msra.mxu0 0
        %474 = vmatprep.subr.bf16.mxu0 0
        %475 = vmatpush1.bf16.xpose.msra.mxu0 0
        %476 = vmatprep.subr.bf16.mxu0 0
        %477 = vmatpush1.bf16.xpose.msra.mxu0 0
        %478 = vmatprep.subr.bf16.mxu0 0
        %479 = vmatpush1.bf16.xpose.msra.mxu0 0
        %480 = vmatprep.subr.bf16.mxu0 0
        %481 = vmatpush1.bf16.xpose.msra.mxu0 0
        %482 = vmatprep.subr.bf16.mxu0 0
        %483 = vmatpush1.bf16.xpose.msra.mxu0 0
        %484 = vmatprep.subr.bf16.mxu0 0
        %485 = vmatpush1.bf16.xpose.msra.mxu0 0
        %486 = vmatprep.subr.bf16.mxu0 0
        %487 = vmatpush1.bf16.xpose.msra.mxu0 %v470
        %488 = vmatprep.subr.bf16.mxu0 0
        %489 = vmatpush2.bf16.xpose.msra.mxu0 0
        %490 = vmatprep.subr.bf16.mxu0 0
        %491 = vmatpush2.bf16.xpose.msra.mxu0 0
        %492 = vmatprep.subr.bf16.mxu0 0
        %493 = vmatpush2.bf16.xpose.msra.mxu0 0
        %494 = vmatprep.subr.bf16.mxu0 0
        %495 = vmatpush2.bf16.xpose.msra.mxu0 0
        %496 = vmatprep.subr.bf16.mxu0 0
        %497 = vmatpush2.bf16.xpose.msra.mxu0 0
        %498 = vmatprep.subr.bf16.mxu0 0
        %499 = vmatpush2.bf16.xpose.msra.mxu0 0
        %500 = vmatprep.subr.bf16.mxu0 0
        %501 = vmatpush2.bf16.xpose.msra.mxu0 0
        %502 = vmatprep.subr.bf16.mxu0 0
        %503 = vmatpush2.bf16.xpose.msra.mxu0 0
        %504 = vmatprep.mubr.bf16.mxu0 0
        %505 = vmatmul.mubr.bf16.gmra.mxu0 %v467
        %v506 = vpop.f32.mrf.mxu0
        %v507 = vadd.f32 0.0, %v506
        %v508 = vpop.f32.mrf.mxu0
        %v509 = vpop.f32.mrf.mxu0
        %v510 = vpop.f32.mrf.mxu0
        %511 = vdwg.mxu0
        %v512 = vsel %vm343, %v507, -10000.0
        %v513 = vsel %vm352, %v512, -inf
        %514 = vmax.xlane.f32.xlu0 %v513
        %v515 = vpop.xlane.xlu0 %514
        %v516 = vsub.f32 %v512, %v515
        %v517 = vmul.f32 %v516, 1.442695
        %v518 = vpow.pop %v517
        %v519 = vsel %vm352, %v518, 0.0
        %520 = vadd.xlane.f32.xlu0 %v519
        %v521 = vpop.xlane.xlu0 %520
        %v522 = vrcp.pop %v521
        %v523 = vpack.c.bf16 %v518, %v518
        %524 = vrot.lane.b32.xlu0 %v348, 56
        %v525 = vpop.permute.xlu0 %524
        %v527 = vsel %vm352, %v523, 0
        %v530 = vsel %vm416, %v525, 0
        %532 = vmatprep.subr.bf16.mxu0 0
        %533 = vmatpush1.bf16.msra.mxu0 0
        %534 = vmatprep.subr.bf16.mxu0 0
        %535 = vmatpush1.bf16.msra.mxu0 0
        %536 = vmatprep.subr.bf16.mxu0 0
        %537 = vmatpush1.bf16.msra.mxu0 0
        %538 = vmatprep.subr.bf16.mxu0 0
        %539 = vmatpush1.bf16.msra.mxu0 0
        %540 = vmatprep.subr.bf16.mxu0 0
        %541 = vmatpush1.bf16.msra.mxu0 0
        %542 = vmatprep.subr.bf16.mxu0 0
        %543 = vmatpush1.bf16.msra.mxu0 0
        %544 = vmatprep.subr.bf16.mxu0 0
        %545 = vmatpush1.bf16.msra.mxu0 0
        %546 = vmatprep.subr.bf16.mxu0 0
        %547 = vmatpush1.bf16.msra.mxu0 %v530
        %548 = vmatprep.subr.bf16.mxu0 0
        %549 = vmatpush2.bf16.msra.mxu0 0
        %550 = vmatprep.subr.bf16.mxu0 0
        %551 = vmatpush2.bf16.msra.mxu0 0
        %552 = vmatprep.subr.bf16.mxu0 0
        %553 = vmatpush2.bf16.msra.mxu0 0
        %554 = vmatprep.subr.bf16.mxu0 0
        %555 = vmatpush2.bf16.msra.mxu0 0
        %556 = vmatprep.subr.bf16.mxu0 0
        %557 = vmatpush2.bf16.msra.mxu0 0
        %558 = vmatprep.subr.bf16.mxu0 0
        %559 = vmatpush2.bf16.msra.mxu0 0
        %560 = vmatprep.subr.bf16.mxu0 0
        %561 = vmatpush2.bf16.msra.mxu0 0
        %562 = vmatprep.subr.bf16.mxu0 0
        %563 = vmatpush2.bf16.msra.mxu0 0
        %564 = vmatprep.mubr.bf16.mxu0 0
        %565 = vmatmul.mubr.bf16.gmra.mxu0 %v527
        %v566 = vpop.f32.mrf.mxu0
        %v567 = vadd.f32 0.0, %v566
        %v568 = vpop.f32.mrf.mxu0
        %v569 = vpop.f32.mrf.mxu0
        %v570 = vpop.f32.mrf.mxu0
        %571 = vdwg.mxu0
        %v572 = vmul.f32 %v567, %v522
        %v573 = vpack.c.bf16 %v572, %v572
        %v575 = vsel %vm352, %v573, 0
        %v578 = vsel %vm416, %v345, 0
        %580 = vmatprep.subr.bf16.mxu0 0
        %581 = vmatpush1.bf16.msra.mxu0 0
        %582 = vmatprep.subr.bf16.mxu0 0
        %583 = vmatpush1.bf16.msra.mxu0 0
        %584 = vmatprep.subr.bf16.mxu0 0
        %585 = vmatpush1.bf16.msra.mxu0 0
        %586 = vmatprep.subr.bf16.mxu0 0
        %587 = vmatpush1.bf16.msra.mxu0 0
        %588 = vmatprep.subr.bf16.mxu0 0
        %589 = vmatpush1.bf16.msra.mxu0 0
        %590 = vmatprep.subr.bf16.mxu0 0
        %591 = vmatpush1.bf16.msra.mxu0 0
        %592 = vmatprep.subr.bf16.mxu0 0
        %593 = vmatpush1.bf16.msra.mxu0 0
        %594 = vmatprep.subr.bf16.mxu0 0
        %595 = vmatpush1.bf16.msra.mxu0 %v578
        %596 = vmatprep.subr.bf16.mxu0 0
        %597 = vmatpush2.bf16.msra.mxu0 0
        %598 = vmatprep.subr.bf16.mxu0 0
        %599 = vmatpush2.bf16.msra.mxu0 0
        %600 = vmatprep.subr.bf16.mxu0 0
        %601 = vmatpush2.bf16.msra.mxu0 0
        %602 = vmatprep.subr.bf16.mxu0 0
        %603 = vmatpush2.bf16.msra.mxu0 0
        %604 = vmatprep.subr.bf16.mxu0 0
        %605 = vmatpush2.bf16.msra.mxu0 0
        %606 = vmatprep.subr.bf16.mxu0 0
        %607 = vmatpush2.bf16.msra.mxu0 0
        %608 = vmatprep.subr.bf16.mxu0 0
        %609 = vmatpush2.bf16.msra.mxu0 0
        %610 = vmatprep.subr.bf16.mxu0 0
        %611 = vmatpush2.bf16.msra.mxu0 0
        %612 = vmatprep.mubr.bf16.mxu0 0
        %613 = vmatmul.mubr.bf16.gmra.mxu0 %v575
        %v614 = vpop.f32.mrf.mxu0
        %v615 = vadd.f32 0.0, %v614
        %v616 = vpop.f32.mrf.mxu0
        %v617 = vpop.f32.mrf.mxu0
        %v618 = vpop.f32.mrf.mxu0
        %619 = vdwg.mxu0
        %v621 = vsel %vm352, %v461, 0
        %v624 = vsel %vm416, %v344, 0
        %626 = vmatprep.subr.bf16.mxu0 0
        %627 = vmatpush1.bf16.msra.mxu0 0
        %628 = vmatprep.subr.bf16.mxu0 0
        %629 = vmatpush1.bf16.msra.mxu0 0
        %630 = vmatprep.subr.bf16.mxu0 0
        %631 = vmatpush1.bf16.msra.mxu0 0
        %632 = vmatprep.subr.bf16.mxu0 0
        %633 = vmatpush1.bf16.msra.mxu0 0
        %634 = vmatprep.subr.bf16.mxu0 0
        %635 = vmatpush1.bf16.msra.mxu0 0
        %636 = vmatprep.subr.bf16.mxu0 0
        %637 = vmatpush1.bf16.msra.mxu0 0
        %638 = vmatprep.subr.bf16.mxu0 0
        %639 = vmatpush1.bf16.msra.mxu0 0
        %640 = vmatprep.subr.bf16.mxu0 0
        %641 = vmatpush1.bf16.msra.mxu0 %v624
        %642 = vmatprep.subr.bf16.mxu0 0
        %643 = vmatpush2.bf16.msra.mxu0 0
        %644 = vmatprep.subr.bf16.mxu0 0
        %645 = vmatpush2.bf16.msra.mxu0 0
        %646 = vmatprep.subr.bf16.mxu0 0
        %647 = vmatpush2.bf16.msra.mxu0 0
        %648 = vmatprep.subr.bf16.mxu0 0
        %649 = vmatpush2.bf16.msra.mxu0 0
        %650 = vmatprep.subr.bf16.mxu0 0
        %651 = vmatpush2.bf16.msra.mxu0 0
        %652 = vmatprep.subr.bf16.mxu0 0
        %653 = vmatpush2.bf16.msra.mxu0 0
        %654 = vmatprep.subr.bf16.mxu0 0
        %655 = vmatpush2.bf16.msra.mxu0 0
        %656 = vmatprep.subr.bf16.mxu0 0
        %657 = vmatpush2.bf16.msra.mxu0 0
        %658 = vmatprep.mubr.bf16.mxu0 0
        %659 = vmatmul.mubr.bf16.gmra.mxu0 %v621
        %v660 = vpop.f32.mrf.mxu0
        %v661 = vadd.f32 %v615, %v660
        %v662 = vpop.f32.mrf.mxu0
        %v663 = vpop.f32.mrf.mxu0
        %v664 = vpop.f32.mrf.mxu0
        %665 = vdwg.mxu0
        %666 = vrot.lane.b32.xlu0 %v348, 112
        %v667 = vpop.permute.xlu0 %666
        %668 = vrot.lane.b32.xlu0 %v348, 80
        %v669 = vpop.permute.xlu0 %668
        %v671 = vsel %vm352, %v667, 0
        %v674 = vsel %vm352, %v669, 0
        %676 = vmatprep.subr.bf16.mxu0 0
        %677 = vmatpush1.bf16.xpose.msra.mxu0 0
        %678 = vmatprep.subr.bf16.mxu0 0
        %679 = vmatpush1.bf16.xpose.msra.mxu0 0
        %680 = vmatprep.subr.bf16.mxu0 0
        %681 = vmatpush1.bf16.xpose.msra.mxu0 0
        %682 = vmatprep.subr.bf16.mxu0 0
        %683 = vmatpush1.bf16.xpose.msra.mxu0 0
        %684 = vmatprep.subr.bf16.mxu0 0
        %685 = vmatpush1.bf16.xpose.msra.mxu0 0
        %686 = vmatprep.subr.bf16.mxu0 0
        %687 = vmatpush1.bf16.xpose.msra.mxu0 0
        %688 = vmatprep.subr.bf16.mxu0 0
        %689 = vmatpush1.bf16.xpose.msra.mxu0 0
        %690 = vmatprep.subr.bf16.mxu0 0
        %691 = vmatpush1.bf16.xpose.msra.mxu0 %v674
        %692 = vmatprep.subr.bf16.mxu0 0
        %693 = vmatpush2.bf16.xpose.msra.mxu0 0
        %694 = vmatprep.subr.bf16.mxu0 0
        %695 = vmatpush2.bf16.xpose.msra.mxu0 0
        %696 = vmatprep.subr.bf16.mxu0 0
        %697 = vmatpush2.bf16.xpose.msra.mxu0 0
        %698 = vmatprep.subr.bf16.mxu0 0
        %699 = vmatpush2.bf16.xpose.msra.mxu0 0
        %700 = vmatprep.subr.bf16.mxu0 0
        %701 = vmatpush2.bf16.xpose.msra.mxu0 0
        %702 = vmatprep.subr.bf16.mxu0 0
        %703 = vmatpush2.bf16.xpose.msra.mxu0 0
        %704 = vmatprep.subr.bf16.mxu0 0
        %705 = vmatpush2.bf16.xpose.msra.mxu0 0
        %706 = vmatprep.subr.bf16.mxu0 0
        %707 = vmatpush2.bf16.xpose.msra.mxu0 0
        %708 = vmatprep.mubr.bf16.mxu0 0
        %709 = vmatmul.mubr.bf16.gmra.mxu0 %v671
        %v710 = vpop.f32.mrf.mxu0
        %v711 = vadd.f32 0.0, %v710
        %v712 = vpop.f32.mrf.mxu0
        %v713 = vpop.f32.mrf.mxu0
        %v714 = vpop.f32.mrf.mxu0
        %715 = vdwg.mxu0
        %v716 = vsel %vm343, %v711, -10000.0
        %v717 = vsel %vm352, %v716, -inf
        %718 = vmax.xlane.f32.xlu0 %v717
        %v719 = vpop.xlane.xlu0 %718
        %v720 = vsub.f32 %v716, %v719
        %v721 = vmul.f32 %v720, 1.442695
        %v722 = vpow.pop %v721
        %v723 = vsel %vm352, %v722, 0.0
        %724 = vadd.xlane.f32.xlu0 %v723
        %v725 = vpop.xlane.xlu0 %724
        %v726 = vrcp.pop %v725
        %v727 = vpack.c.bf16 %v722, %v722
        %728 = vrot.lane.b32.xlu0 %v348, 48
        %v729 = vpop.permute.xlu0 %728
        %v731 = vsel %vm352, %v727, 0
        %v734 = vsel %vm416, %v729, 0
        %736 = vmatprep.subr.bf16.mxu0 0
        %737 = vmatpush1.bf16.msra.mxu0 0
        %738 = vmatprep.subr.bf16.mxu0 0
        %739 = vmatpush1.bf16.msra.mxu0 0
        %740 = vmatprep.subr.bf16.mxu0 0
        %741 = vmatpush1.bf16.msra.mxu0 0
        %742 = vmatprep.subr.bf16.mxu0 0
        %743 = vmatpush1.bf16.msra.mxu0 0
        %744 = vmatprep.subr.bf16.mxu0 0
        %745 = vmatpush1.bf16.msra.mxu0 0
        %746 = vmatprep.subr.bf16.mxu0 0
        %747 = vmatpush1.bf16.msra.mxu0 0
        %748 = vmatprep.subr.bf16.mxu0 0
        %749 = vmatpush1.bf16.msra.mxu0 0
        %750 = vmatprep.subr.bf16.mxu0 0
        %751 = vmatpush1.bf16.msra.mxu0 %v734
        %752 = vmatprep.subr.bf16.mxu0 0
        %753 = vmatpush2.bf16.msra.mxu0 0
        %754 = vmatprep.subr.bf16.mxu0 0
        %755 = vmatpush2.bf16.msra.mxu0 0
        %756 = vmatprep.subr.bf16.mxu0 0
        %757 = vmatpush2.bf16.msra.mxu0 0
        %758 = vmatprep.subr.bf16.mxu0 0
        %759 = vmatpush2.bf16.msra.mxu0 0
        %760 = vmatprep.subr.bf16.mxu0 0
        %761 = vmatpush2.bf16.msra.mxu0 0
        %762 = vmatprep.subr.bf16.mxu0 0
        %763 = vmatpush2.bf16.msra.mxu0 0
        %764 = vmatprep.subr.bf16.mxu0 0
        %765 = vmatpush2.bf16.msra.mxu0 0
        %766 = vmatprep.subr.bf16.mxu0 0
        %767 = vmatpush2.bf16.msra.mxu0 0
        %768 = vmatprep.mubr.bf16.mxu0 0
        %769 = vmatmul.mubr.bf16.gmra.mxu0 %v731
        %v770 = vpop.f32.mrf.mxu0
        %v771 = vadd.f32 0.0, %v770
        %v772 = vpop.f32.mrf.mxu0
        %v773 = vpop.f32.mrf.mxu0
        %v774 = vpop.f32.mrf.mxu0
        %775 = vdwg.mxu0
        %v776 = vmul.f32 %v771, %v726
        %v777 = vpack.c.bf16 %v776, %v776
        %v779 = vsel %vm352, %v777, 0
        %v782 = vsel %vm416, %v346, 0
        %784 = vmatprep.subr.bf16.mxu0 0
        %785 = vmatpush1.bf16.msra.mxu0 0
        %786 = vmatprep.subr.bf16.mxu0 0
        %787 = vmatpush1.bf16.msra.mxu0 0
        %788 = vmatprep.subr.bf16.mxu0 0
        %789 = vmatpush1.bf16.msra.mxu0 0
        %790 = vmatprep.subr.bf16.mxu0 0
        %791 = vmatpush1.bf16.msra.mxu0 0
        %792 = vmatprep.subr.bf16.mxu0 0
        %793 = vmatpush1.bf16.msra.mxu0 0
        %794 = vmatprep.subr.bf16.mxu0 0
        %795 = vmatpush1.bf16.msra.mxu0 0
        %796 = vmatprep.subr.bf16.mxu0 0
        %797 = vmatpush1.bf16.msra.mxu0 0
        %798 = vmatprep.subr.bf16.mxu0 0
        %799 = vmatpush1.bf16.msra.mxu0 %v782
        %800 = vmatprep.subr.bf16.mxu0 0
        %801 = vmatpush2.bf16.msra.mxu0 0
        %802 = vmatprep.subr.bf16.mxu0 0
        %803 = vmatpush2.bf16.msra.mxu0 0
        %804 = vmatprep.subr.bf16.mxu0 0
        %805 = vmatpush2.bf16.msra.mxu0 0
        %806 = vmatprep.subr.bf16.mxu0 0
        %807 = vmatpush2.bf16.msra.mxu0 0
        %808 = vmatprep.subr.bf16.mxu0 0
        %809 = vmatpush2.bf16.msra.mxu0 0
        %810 = vmatprep.subr.bf16.mxu0 0
        %811 = vmatpush2.bf16.msra.mxu0 0
        %812 = vmatprep.subr.bf16.mxu0 0
        %813 = vmatpush2.bf16.msra.mxu0 0
        %814 = vmatprep.subr.bf16.mxu0 0
        %815 = vmatpush2.bf16.msra.mxu0 0
        %816 = vmatprep.mubr.bf16.mxu0 0
        %817 = vmatmul.mubr.bf16.gmra.mxu0 %v779
        %v818 = vpop.f32.mrf.mxu0
        %v819 = vadd.f32 0.0, %v818
        %v820 = vpop.f32.mrf.mxu0
        %v821 = vpop.f32.mrf.mxu0
        %v822 = vpop.f32.mrf.mxu0
        %823 = vdwg.mxu0
        %v824 = vadd.f32 %v661, %v819
        %825 = vrot.lane.b32.xlu0 %v348, 104
        %v826 = vpop.permute.xlu0 %825
        %827 = vrot.lane.b32.xlu0 %v348, 72
        %v828 = vpop.permute.xlu0 %827
        %v830 = vsel %vm352, %v826, 0
        %v833 = vsel %vm352, %v828, 0
        %835 = vmatprep.subr.bf16.mxu0 0
        %836 = vmatpush1.bf16.xpose.msra.mxu0 0
        %837 = vmatprep.subr.bf16.mxu0 0
        %838 = vmatpush1.bf16.xpose.msra.mxu0 0
        %839 = vmatprep.subr.bf16.mxu0 0
        %840 = vmatpush1.bf16.xpose.msra.mxu0 0
        %841 = vmatprep.subr.bf16.mxu0 0
        %842 = vmatpush1.bf16.xpose.msra.mxu0 0
        %843 = vmatprep.subr.bf16.mxu0 0
        %844 = vmatpush1.bf16.xpose.msra.mxu0 0
        %845 = vmatprep.subr.bf16.mxu0 0
        %846 = vmatpush1.bf16.xpose.msra.mxu0 0
        %847 = vmatprep.subr.bf16.mxu0 0
        %848 = vmatpush1.bf16.xpose.msra.mxu0 0
        %849 = vmatprep.subr.bf16.mxu0 0
        %850 = vmatpush1.bf16.xpose.msra.mxu0 %v833
        %851 = vmatprep.subr.bf16.mxu0 0
        %852 = vmatpush2.bf16.xpose.msra.mxu0 0
        %853 = vmatprep.subr.bf16.mxu0 0
        %854 = vmatpush2.bf16.xpose.msra.mxu0 0
        %855 = vmatprep.subr.bf16.mxu0 0
        %856 = vmatpush2.bf16.xpose.msra.mxu0 0
        %857 = vmatprep.subr.bf16.mxu0 0
        %858 = vmatpush2.bf16.xpose.msra.mxu0 0
        %859 = vmatprep.subr.bf16.mxu0 0
        %860 = vmatpush2.bf16.xpose.msra.mxu0 0
        %861 = vmatprep.subr.bf16.mxu0 0
        %862 = vmatpush2.bf16.xpose.msra.mxu0 0
        %863 = vmatprep.subr.bf16.mxu0 0
        %864 = vmatpush2.bf16.xpose.msra.mxu0 0
        %865 = vmatprep.subr.bf16.mxu0 0
        %866 = vmatpush2.bf16.xpose.msra.mxu0 0
        %867 = vmatprep.mubr.bf16.mxu0 0
        %868 = vmatmul.mubr.bf16.gmra.mxu0 %v830
        %v869 = vpop.f32.mrf.mxu0
        %v870 = vadd.f32 0.0, %v869
        %v871 = vpop.f32.mrf.mxu0
        %v872 = vpop.f32.mrf.mxu0
        %v873 = vpop.f32.mrf.mxu0
        %874 = vdwg.mxu0
        %v875 = vsel %vm343, %v870, -10000.0
        %v876 = vsel %vm352, %v875, -inf
        %877 = vmax.xlane.f32.xlu0 %v876
        %v878 = vpop.xlane.xlu0 %877
        %v879 = vsub.f32 %v875, %v878
        %v880 = vmul.f32 %v879, 1.442695
        %v881 = vpow.pop %v880
        %v882 = vsel %vm352, %v881, 0.0
        %883 = vadd.xlane.f32.xlu0 %v882
        %v884 = vpop.xlane.xlu0 %883
        %v885 = vrcp.pop %v884
        %v886 = vpack.c.bf16 %v881, %v881
        %887 = vrot.lane.b32.xlu0 %v348, 40
        %v888 = vpop.permute.xlu0 %887
        %v890 = vsel %vm352, %v886, 0
        %v893 = vsel %vm416, %v888, 0
        %895 = vmatprep.subr.bf16.mxu0 0
        %896 = vmatpush1.bf16.msra.mxu0 0
        %897 = vmatprep.subr.bf16.mxu0 0
        %898 = vmatpush1.bf16.msra.mxu0 0
        %899 = vmatprep.subr.bf16.mxu0 0
        %900 = vmatpush1.bf16.msra.mxu0 0
        %901 = vmatprep.subr.bf16.mxu0 0
        %902 = vmatpush1.bf16.msra.mxu0 0
        %903 = vmatprep.subr.bf16.mxu0 0
        %904 = vmatpush1.bf16.msra.mxu0 0
        %905 = vmatprep.subr.bf16.mxu0 0
        %906 = vmatpush1.bf16.msra.mxu0 0
        %907 = vmatprep.subr.bf16.mxu0 0
        %908 = vmatpush1.bf16.msra.mxu0 0
        %909 = vmatprep.subr.bf16.mxu0 0
        %910 = vmatpush1.bf16.msra.mxu0 %v893
        %911 = vmatprep.subr.bf16.mxu0 0
        %912 = vmatpush2.bf16.msra.mxu0 0
        %913 = vmatprep.subr.bf16.mxu0 0
        %914 = vmatpush2.bf16.msra.mxu0 0
        %915 = vmatprep.subr.bf16.mxu0 0
        %916 = vmatpush2.bf16.msra.mxu0 0
        %917 = vmatprep.subr.bf16.mxu0 0
        %918 = vmatpush2.bf16.msra.mxu0 0
        %919 = vmatprep.subr.bf16.mxu0 0
        %920 = vmatpush2.bf16.msra.mxu0 0
        %921 = vmatprep.subr.bf16.mxu0 0
        %922 = vmatpush2.bf16.msra.mxu0 0
        %923 = vmatprep.subr.bf16.mxu0 0
        %924 = vmatpush2.bf16.msra.mxu0 0
        %925 = vmatprep.subr.bf16.mxu0 0
        %926 = vmatpush2.bf16.msra.mxu0 0
        %927 = vmatprep.mubr.bf16.mxu0 0
        %928 = vmatmul.mubr.bf16.gmra.mxu0 %v890
        %v929 = vpop.f32.mrf.mxu0
        %v930 = vadd.f32 0.0, %v929
        %v931 = vpop.f32.mrf.mxu0
        %v932 = vpop.f32.mrf.mxu0
        %v933 = vpop.f32.mrf.mxu0
        %934 = vdwg.mxu0
        %v935 = vmul.f32 %v930, %v885
        %v936 = vpack.c.bf16 %v935, %v935
        %v938 = vsel %vm352, %v936, 0
        %v941 = vsel %vm416, %v347, 0
        %943 = vmatprep.subr.bf16.mxu0 0
        %944 = vmatpush1.bf16.msra.mxu0 0
        %945 = vmatprep.subr.bf16.mxu0 0
        %946 = vmatpush1.bf16.msra.mxu0 0
        %947 = vmatprep.subr.bf16.mxu0 0
        %948 = vmatpush1.bf16.msra.mxu0 0
        %949 = vmatprep.subr.bf16.mxu0 0
        %950 = vmatpush1.bf16.msra.mxu0 0
        %951 = vmatprep.subr.bf16.mxu0 0
        %952 = vmatpush1.bf16.msra.mxu0 0
        %953 = vmatprep.subr.bf16.mxu0 0
        %954 = vmatpush1.bf16.msra.mxu0 0
        %955 = vmatprep.subr.bf16.mxu0 0
        %956 = vmatpush1.bf16.msra.mxu0 0
        %957 = vmatprep.subr.bf16.mxu0 0
        %958 = vmatpush1.bf16.msra.mxu0 %v941
        %959 = vmatprep.subr.bf16.mxu0 0
        %960 = vmatpush2.bf16.msra.mxu0 0
        %961 = vmatprep.subr.bf16.mxu0 0
        %962 = vmatpush2.bf16.msra.mxu0 0
        %963 = vmatprep.subr.bf16.mxu0 0
        %964 = vmatpush2.bf16.msra.mxu0 0
        %965 = vmatprep.subr.bf16.mxu0 0
        %966 = vmatpush2.bf16.msra.mxu0 0
        %967 = vmatprep.subr.bf16.mxu0 0
        %968 = vmatpush2.bf16.msra.mxu0 0
        %969 = vmatprep.subr.bf16.mxu0 0
        %970 = vmatpush2.bf16.msra.mxu0 0
        %971 = vmatprep.subr.bf16.mxu0 0
        %972 = vmatpush2.bf16.msra.mxu0 0
        %973 = vmatprep.subr.bf16.mxu0 0
        %974 = vmatpush2.bf16.msra.mxu0 0
        %975 = vmatprep.mubr.bf16.mxu0 0
        %976 = vmatmul.mubr.bf16.gmra.mxu0 %v938
        %v977 = vpop.f32.mrf.mxu0
        %v978 = vadd.f32 0.0, %v977
        %v979 = vpop.f32.mrf.mxu0
        %v980 = vpop.f32.mrf.mxu0
        %v981 = vpop.f32.mrf.mxu0
        %982 = vdwg.mxu0
        %v983 = vadd.f32 %v824, %v978
        %v984 = vld [vmem:[%s4] sm:$0x1]
        %v986 = vlaneseq
        %v987 = vshrl.u32 %v986, 7
        %v988 = vsub.s32 0, %v987
        %v989 = vrot.slane %v984, %v988
        %v991 = vadd.f32 %v983, %v989
        %992 = vst.msk [vmem:[%s268] sm:$0xff] %vm295, %v991
        %s993 = sand.u32 %s141, 1
        %s994 = scalar_lea.sflag [#allocation4], %s993
        %s995 = sand.u32 %s141, 1
        %s996 = smul.addr %s995, 8
        %s997 = scalar_lea.vmem [#allocation8], %s996
        // Predicated region
        $region53: #{tpu_custom_call.1} parent=39 // pred_check
          %p998 = pneg %p151
        $region54: #{tpu_custom_call.1} parent=39 // pred_check_branch
          %1000 = sbr.rel (%p998) target = $region56
        $region55: #{tpu_custom_call.1} parent=39 // pred_region
          %s1002 = ssub.s32 128, 128
          %1003 = vsyncadd %s994, %s1002
          %s1004 = smul.addr %s23, 128
          %s1005 = scalar_lea.hbm %s5, %s1004
          %s1007 = sshll.u32 %s997, 4
          %s1008 = int_to_ptr.vmem [resolvable:$true] %s1007
          %1010 = dma.vmem_to_hbm [thread:$0]  %s1008, 128, %s1005, %s994
        $region56: #{tpu_custom_call.1} parent=39 // pred_fallthru
          _
      $region40: #{tpu_custom_call.1} parent=5 // pred_fallthru
        _
      %p1011 = scmp.le.s32.totalorder 2, %s18
      // Predicated region
      $region57: #{tpu_custom_call.1} parent=5 // pred_check
        %p1012 = pneg %p1011
      $region58: #{tpu_custom_call.1} parent=5 // pred_check_branch
        %1014 = sbr.rel (%p1012) target = $region60
      $region59: #{tpu_custom_call.1} parent=5 // pred_region
        %s1015 = ssub.s32 %s18, 2
        // Predicated region
        $region61: #{tpu_custom_call.1} parent=59 // pred_check
          %p1016 = pneg %p157
        $region62: #{tpu_custom_call.1} parent=59 // pred_check_branch
          %1018 = sbr.rel (%p1016) target = $region64
        $region63: #{tpu_custom_call.1} parent=59 // pred_region
          %s1019 = sand.u32 %s142, 1
          %s1020 = scalar_lea.sflag [#allocation4], %s1019
          %s1021 = sand.u32 %s142, 1
          %s1022 = smul.addr %s1021, 8
          %s1023 = scalar_lea.vmem [#allocation8], %s1022
          %1024 = dma.done %s1020, 128
        $region64: #{tpu_custom_call.1} parent=59 // pred_fallthru
          _
      $region60: #{tpu_custom_call.1} parent=5 // pred_fallthru
        _
    $region6: #{tpu_custom_call.1} parent=1 // loop_footer
      %s22 = sadd.s32 1, %s18
    $region7: #{tpu_custom_call.1} parent=1 // loop_footer_branch
      %17 = sbr.rel target = $region3
    $region8: #{tpu_custom_call.1} parent=1 // loop_exit
      _
    %1025 = vsyncpa [#allocation3], 1
    %s1026 = scalar_lea.sflag [#allocation3], 1
    %1027 = vsyncpa %s1026, 1
    %1028 = vsyncpa [#allocation6], 1
    %1029 = vsyncpa [#allocation4], 1
    %s1030 = scalar_lea.sflag [#allocation4], 1
    %1031 = vsyncpa %s1030, 1

</llo_original>
